<compile_context>
chip_gen: v7x
topology: tpu7x:2x2x1
jax: 0.10.0
libtpu: 0.0.40
codegen_flags: <defaults>
</compile_context>

<pallas_src>
import functools

import jax
import jax.numpy as jnp
from jax.experimental import pallas as pl
from jax.experimental.pallas import tpu as pltpu

# Fixed (non-trainable) Sobel kernels, exactly as in the PyTorch module.
_KV = ((-1.0, -2.0, -1.0),
       ( 0.0,  0.0,  0.0),
       ( 1.0,  2.0,  1.0))
_KH = ((-1.0,  0.0,  1.0),
       (-2.0,  0.0,  2.0),
       (-1.0,  0.0,  1.0))


def _sobel_kernel(x_ref, halo_ref, pos_ref, o_ref, *, H, W, TR):
    # x_ref:    (TR, W)    row-strip of the flattened (P*H, W) image stack
    # halo_ref: (1, 2, W)  [row above strip, row below strip] (zeros across plane edges)
    # pos_ref:  (TR, 1)    row index within its plane (0 .. H-1) for every strip row
    x = x_ref[...].astype(jnp.float32)              # (TR, W)
    halo = halo_ref[0].astype(jnp.float32)          # (2, W)
    pos = pos_ref[...]                              # (TR, 1) int32

    def w_terms(a):
        # smooth[., j] = a[., j-1] + 2 a[., j] + a[., j+1]
        # diff  [., j] = a[., j+1] - a[., j-1]          (zeros outside the image)
        if W > 1:
            col = jax.lax.broadcasted_iota(jnp.int32, a.shape, 1)
            left = jnp.where(col == 0, 0.0, pltpu.roll(a, 1, axis=1))
            right = jnp.where(col == W - 1, 0.0, pltpu.roll(a, W - 1, axis=1))
        else:
            left = jnp.zeros_like(a)
            right = jnp.zeros_like(a)
        return left + 2.0 * a + right, right - left

    s_x, d_x = w_terms(x)            # (TR, W) column-smoothed / column-diffed strip
    s_h, d_h = w_terms(halo)         # (2, W)  same for the two halo rows

    row = jax.lax.broadcasted_iota(jnp.int32, (TR, 1), 0)   # local row within strip
    plane_top = pos == 0             # first row of its plane  -> neighbour above is 0
    plane_bot = pos == H - 1         # last row of its plane   -> neighbour below is 0
    strip_top = row == 0
    strip_bot = row == TR - 1

    def shift_up(a, top_row):        # result[y] = a[y-1] (halo / zero at boundaries)
        u = pltpu.roll(a, 1, axis=0) if TR > 1 else a
        u = jnp.where(plane_top, 0.0, u)
        return jnp.where(strip_top, top_row, u)

    def shift_dn(a, bot_row):        # result[y] = a[y+1]
        d = pltpu.roll(a, TR - 1, axis=0) if TR > 1 else a
        d = jnp.where(plane_bot, 0.0, d)
        return jnp.where(strip_bot, bot_row, d)

    # gv[y,x] = smoothW(x)[y+1] - smoothW(x)[y-1]
    # gh[y,x] = diffW(x)[y-1] + 2 diffW(x)[y] + diffW(x)[y+1]
    gv = shift_dn(s_x, s_h[1:2]) - shift_up(s_x, s_h[0:1])
    gh = shift_up(d_x, d_h[0:1]) + 2.0 * d_x + shift_dn(d_x, d_h[1:2])

    o_ref[...] = jnp.sqrt(gv * gv + gh * gh + 1e-6).astype(o_ref.dtype)


def get_gradient_nopadding(x, *, target_block_bytes=2 * 1024 * 1024):
    """x: (N, C, H, W) float array -> (N, C, H, W) Sobel gradient magnitude."""
    N, C, H, W = x.shape
    P = N * C
    rows = P * H
    xr = x.reshape(rows, W)
    itemsize = jnp.dtype(x.dtype).itemsize
    row_bytes = max(1, W * itemsize)

    # --- choose rows-per-block: multiple of 8 (or the whole array), ~target bytes ---
    tr_cap = max(8, (target_block_bytes // row_bytes) // 8 * 8)
    tr = min(rows, tr_cap)
    if tr >= rows and rows > 8:
        # split into >= 2 blocks so megacore / dual-TC (v7x) can shard the grid
        tr = max(8, ((rows + 1) // 2 + 7) // 8 * 8)
        tr = min(tr, rows)
    num_strips = -(-rows // tr)

    # --- per-strip halo rows: the true row above / below each strip (zero across
    #     plane boundaries or outside the array) ---
    starts = jnp.arange(num_strips, dtype=jnp.int32) * tr
    above = starts - 1
    below = starts + tr
    has_above = (starts % H) != 0
    has_below = (below < rows) & ((below % H) != 0)
    top = jnp.where(has_above[:, None], xr[jnp.clip(above, 0, rows - 1)], 0).astype(x.dtype)
    bot = jnp.where(has_below[:, None], xr[jnp.clip(below, 0, rows - 1)], 0).astype(x.dtype)
    halo = jnp.stack([top, bot], axis=1)                       # (S, 2, W)

    # --- row-within-plane index for every flattened row (tiny: 4 bytes / row) ---
    rowpos = jnp.tile(jnp.arange(H, dtype=jnp.int32), P)[:, None]   # (rows, 1)

    block_bytes = tr * W * itemsize
    vmem_limit = int(min(48 * 1024 * 1024, max(32 * 1024 * 1024, 6 * block_bytes)))

    kernel = functools.partial(_sobel_kernel, H=H, W=W, TR=tr)

    out = pl.pallas_call(
        kernel,
        out_shape=jax.ShapeDtypeStruct((rows, W), x.dtype),
        grid_spec=pltpu.PrefetchScalarGridSpec(
            num_scalar_prefetch=0,
            grid=(num_strips,),
            in_specs=[
                pl.BlockSpec((tr, W), lambda i: (i, 0)),
                pl.BlockSpec((1, 2, W), lambda i: (i, 0, 0)),
                pl.BlockSpec((tr, 1), lambda i: (i, 0)),
            ],
            out_specs=pl.BlockSpec((tr, W), lambda i: (i, 0)),
        ),
        compiler_params=pltpu.CompilerParams(
            dimension_semantics=("parallel",),
            vmem_limit_bytes=vmem_limit,
        ),
        cost_estimate=pl.CostEstimate(
            flops=20 * rows * W,
            transcendentals=rows * W,
            bytes_accessed=2 * rows * W * itemsize,
        ),
    )(xr, halo, rowpos)
    return out.reshape(N, C, H, W)


def _reference(x):
    # Pure-JAX reference (direct 3x3 cross-correlation, padding=1) for sanity checks.
    N, C, H, W = x.shape
    xp = jnp.pad(x.astype(jnp.float32), ((0, 0), (0, 0), (1, 1), (1, 1)))
    gv = jnp.zeros((N, C, H, W), jnp.float32)
    gh = jnp.zeros((N, C, H, W), jnp.float32)
    for dy in range(3):
        for dx in range(3):
            win = xp[:, :, dy:dy + H, dx:dx + W]
            gv = gv + _KV[dy][dx] * win
            gh = gh + _KH[dy][dx] * win
    return jnp.sqrt(gv * gv + gh * gh + 1e-6).astype(x.dtype)


if __name__ == "__main__":
    key = jax.random.PRNGKey(0)

    # Main test: shape implied by the module (batch=2, channels=4, 16x16 planes).
    x = jax.random.normal(key, (2, 4, 16, 16), dtype=jnp.float32)
    y = get_gradient_nopadding(x)
    jax.block_until_ready(y)
    y_ref = _reference(x)
    assert y.shape == x.shape and y.dtype == x.dtype
    assert jnp.allclose(y, y_ref, atol=1e-4, rtol=1e-4)

    # Second test: forces multiple row-strips, strips that straddle plane boundaries,
    # and a partial last block (exercises the halo / boundary-mask logic).
    x2 = jax.random.normal(jax.random.PRNGKey(0), (1, 3, 24, 128), dtype=jnp.float32)
    y2 = get_gradient_nopadding(x2, target_block_bytes=16 * 1024)
    jax.block_until_ready(y2)
    y2_ref = _reference(x2)
    assert jnp.allclose(y2, y2_ref, atol=1e-4, rtol=1e-4)

    print("KERNEL_OK")
</pallas_src>

<mosaic_0001>
module attributes {stable_mosaic.version = 11 : i64} {
  func.func @_sobel_kernel(%arg0: i32, %arg1: memref<64x16xf32, #tpu.memory_space<vmem>>, %arg2: memref<1x2x16xf32, #tpu.memory_space<vmem>>, %arg3: memref<64x1xi32, #tpu.memory_space<vmem>>, %arg4: memref<64x16xf32, #tpu.memory_space<vmem>>) attributes {dimension_semantics = [#tpu.dimension_semantics<parallel>], iteration_bounds = array<i64: 2>, scalar_prefetch = 0 : i64, scratch_operands = 0 : i64, tpu.core_type = #tpu.core_type<tc>, window_params = [{transform_indices = @transform_0, window_bounds = array<i64: 64, 16>}, {transform_indices = @transform_1, window_bounds = array<i64: 1, 2, 16>}, {transform_indices = @transform_2, window_bounds = array<i64: 64, 1>}, {transform_indices = @transform_3, window_bounds = array<i64: 64, 16>}]} {
    %c0 = arith.constant 0 : index
    %c0_0 = arith.constant 0 : index
    %0 = vector.load %arg1[%c0, %c0_0] : memref<64x16xf32, #tpu.memory_space<vmem>>, vector<64x16xf32>
    %c0_1 = arith.constant 0 : index
    %c0_2 = arith.constant 0 : index
    %c0_3 = arith.constant 0 : index
    %1 = vector.load %arg2[%c0_1, %c0_2, %c0_3] : memref<1x2x16xf32, #tpu.memory_space<vmem>>, vector<1x2x16xf32>
    %2 = vector.shape_cast %1 : vector<1x2x16xf32> to vector<2x16xf32>
    %c0_4 = arith.constant 0 : index
    %c0_5 = arith.constant 0 : index
    %3 = vector.load %arg3[%c0_4, %c0_5] : memref<64x1xi32, #tpu.memory_space<vmem>>, vector<64x1xi32>
    %4 = tpu.iota {dimensions = array<i32: 1>} : vector<64x16xi32>
    %c0_i32 = arith.constant 0 : i32
    %5 = vector.broadcast %c0_i32 : i32 to vector<64x16xi32>
    %6 = arith.cmpi eq, %4, %5 : vector<64x16xi32>
    %c1_i32 = arith.constant 1 : i32
    %7 = tpu.dynamic_rotate %0 by %c1_i32 dim 1 : vector<64x16xf32>, i32 -> vector<64x16xf32>
    %cst = arith.constant 0.000000e+00 : f32
    %8 = vector.broadcast %cst : f32 to vector<64x16xf32>
    %9 = arith.select %6, %8, %7 : vector<64x16xi1>, vector<64x16xf32>
    %c15_i32 = arith.constant 15 : i32
    %10 = vector.broadcast %c15_i32 : i32 to vector<64x16xi32>
    %11 = arith.cmpi eq, %4, %10 : vector<64x16xi32>
    %c15_i32_6 = arith.constant 15 : i32
    %12 = tpu.dynamic_rotate %0 by %c15_i32_6 dim 1 : vector<64x16xf32>, i32 -> vector<64x16xf32>
    %cst_7 = arith.constant 0.000000e+00 : f32
    %13 = vector.broadcast %cst_7 : f32 to vector<64x16xf32>
    %14 = arith.select %11, %13, %12 : vector<64x16xi1>, vector<64x16xf32>
    %cst_8 = arith.constant 2.000000e+00 : f32
    %15 = vector.broadcast %cst_8 : f32 to vector<64x16xf32>
    %16 = arith.mulf %15, %0 : vector<64x16xf32>
    %17 = arith.addf %9, %16 : vector<64x16xf32>
    %18 = arith.addf %17, %14 : vector<64x16xf32>
    %19 = arith.subf %14, %9 : vector<64x16xf32>
    %20 = tpu.iota {dimensions = array<i32: 1>} : vector<2x16xi32>
    %c0_i32_9 = arith.constant 0 : i32
    %21 = vector.broadcast %c0_i32_9 : i32 to vector<2x16xi32>
    %22 = arith.cmpi eq, %20, %21 : vector<2x16xi32>
    %c1_i32_10 = arith.constant 1 : i32
    %23 = tpu.dynamic_rotate %2 by %c1_i32_10 dim 1 : vector<2x16xf32>, i32 -> vector<2x16xf32>
    %cst_11 = arith.constant 0.000000e+00 : f32
    %24 = vector.broadcast %cst_11 : f32 to vector<2x16xf32>
    %25 = arith.select %22, %24, %23 : vector<2x16xi1>, vector<2x16xf32>
    %c15_i32_12 = arith.constant 15 : i32
    %26 = vector.broadcast %c15_i32_12 : i32 to vector<2x16xi32>
    %27 = arith.cmpi eq, %20, %26 : vector<2x16xi32>
    %c15_i32_13 = arith.constant 15 : i32
    %28 = tpu.dynamic_rotate %2 by %c15_i32_13 dim 1 : vector<2x16xf32>, i32 -> vector<2x16xf32>
    %cst_14 = arith.constant 0.000000e+00 : f32
    %29 = vector.broadcast %cst_14 : f32 to vector<2x16xf32>
    %30 = arith.select %27, %29, %28 : vector<2x16xi1>, vector<2x16xf32>
    %cst_15 = arith.constant 2.000000e+00 : f32
    %31 = vector.broadcast %cst_15 : f32 to vector<2x16xf32>
    %32 = arith.mulf %31, %2 : vector<2x16xf32>
    %33 = arith.addf %25, %32 : vector<2x16xf32>
    %34 = arith.addf %33, %30 : vector<2x16xf32>
    %35 = arith.subf %30, %25 : vector<2x16xf32>
    %36 = tpu.iota {dimensions = array<i32: 0>} : vector<64x1xi32>
    %c0_i32_16 = arith.constant 0 : i32
    %37 = vector.broadcast %c0_i32_16 : i32 to vector<64x1xi32>
    %38 = arith.cmpi eq, %3, %37 : vector<64x1xi32>
    %c15_i32_17 = arith.constant 15 : i32
    %39 = vector.broadcast %c15_i32_17 : i32 to vector<64x1xi32>
    %40 = arith.cmpi eq, %3, %39 : vector<64x1xi32>
    %c0_i32_18 = arith.constant 0 : i32
    %41 = vector.broadcast %c0_i32_18 : i32 to vector<64x1xi32>
    %42 = arith.cmpi eq, %36, %41 : vector<64x1xi32>
    %c63_i32 = arith.constant 63 : i32
    %43 = vector.broadcast %c63_i32 : i32 to vector<64x1xi32>
    %44 = arith.cmpi eq, %36, %43 : vector<64x1xi32>
    %45 = vector.extract_strided_slice %34 {offsets = [1, 0], sizes = [1, 16], strides = [1, 1]} : vector<2x16xf32> to vector<1x16xf32>
    %c63_i32_19 = arith.constant 63 : i32
    %46 = tpu.dynamic_rotate %18 by %c63_i32_19 dim 0 : vector<64x16xf32>, i32 -> vector<64x16xf32>
    %cst_20 = arith.constant 0.000000e+00 : f32
    %47 = vector.shape_cast %40 : vector<64x1xi1> to vector<64x1xi1>
    %48 = vector.broadcast %47 : vector<64x1xi1> to vector<64x16xi1>
    %49 = vector.broadcast %cst_20 : f32 to vector<64x16xf32>
    %50 = arith.select %48, %49, %46 : vector<64x16xi1>, vector<64x16xf32>
    %51 = vector.shape_cast %44 : vector<64x1xi1> to vector<64x1xi1>
    %52 = vector.broadcast %51 : vector<64x1xi1> to vector<64x16xi1>
    %53 = vector.shape_cast %45 : vector<1x16xf32> to vector<1x16xf32>
    %54 = vector.broadcast %53 : vector<1x16xf32> to vector<64x16xf32>
    %55 = arith.select %52, %54, %50 : vector<64x16xi1>, vector<64x16xf32>
    %56 = vector.extract_strided_slice %34 {offsets = [0, 0], sizes = [1, 16], strides = [1, 1]} : vector<2x16xf32> to vector<1x16xf32>
    %c1_i32_21 = arith.constant 1 : i32
    %57 = tpu.dynamic_rotate %18 by %c1_i32_21 dim 0 : vector<64x16xf32>, i32 -> vector<64x16xf32>
    %cst_22 = arith.constant 0.000000e+00 : f32
    %58 = vector.shape_cast %38 : vector<64x1xi1> to vector<64x1xi1>
    %59 = vector.broadcast %58 : vector<64x1xi1> to vector<64x16xi1>
    %60 = vector.broadcast %cst_22 : f32 to vector<64x16xf32>
    %61 = arith.select %59, %60, %57 : vector<64x16xi1>, vector<64x16xf32>
    %62 = vector.shape_cast %42 : vector<64x1xi1> to vector<64x1xi1>
    %63 = vector.broadcast %62 : vector<64x1xi1> to vector<64x16xi1>
    %64 = vector.shape_cast %56 : vector<1x16xf32> to vector<1x16xf32>
    %65 = vector.broadcast %64 : vector<1x16xf32> to vector<64x16xf32>
    %66 = arith.select %63, %65, %61 : vector<64x16xi1>, vector<64x16xf32>
    %67 = arith.subf %55, %66 : vector<64x16xf32>
    %68 = vector.extract_strided_slice %35 {offsets = [0, 0], sizes = [1, 16], strides = [1, 1]} : vector<2x16xf32> to vector<1x16xf32>
    %c1_i32_23 = arith.constant 1 : i32
    %69 = tpu.dynamic_rotate %19 by %c1_i32_23 dim 0 : vector<64x16xf32>, i32 -> vector<64x16xf32>
    %cst_24 = arith.constant 0.000000e+00 : f32
    %70 = vector.shape_cast %38 : vector<64x1xi1> to vector<64x1xi1>
    %71 = vector.broadcast %70 : vector<64x1xi1> to vector<64x16xi1>
    %72 = vector.broadcast %cst_24 : f32 to vector<64x16xf32>
    %73 = arith.select %71, %72, %69 : vector<64x16xi1>, vector<64x16xf32>
    %74 = vector.shape_cast %42 : vector<64x1xi1> to vector<64x1xi1>
    %75 = vector.broadcast %74 : vector<64x1xi1> to vector<64x16xi1>
    %76 = vector.shape_cast %68 : vector<1x16xf32> to vector<1x16xf32>
    %77 = vector.broadcast %76 : vector<1x16xf32> to vector<64x16xf32>
    %78 = arith.select %75, %77, %73 : vector<64x16xi1>, vector<64x16xf32>
    %cst_25 = arith.constant 2.000000e+00 : f32
    %79 = vector.broadcast %cst_25 : f32 to vector<64x16xf32>
    %80 = arith.mulf %79, %19 : vector<64x16xf32>
    %81 = arith.addf %78, %80 : vector<64x16xf32>
    %82 = vector.extract_strided_slice %35 {offsets = [1, 0], sizes = [1, 16], strides = [1, 1]} : vector<2x16xf32> to vector<1x16xf32>
    %c63_i32_26 = arith.constant 63 : i32
    %83 = tpu.dynamic_rotate %19 by %c63_i32_26 dim 0 : vector<64x16xf32>, i32 -> vector<64x16xf32>
    %cst_27 = arith.constant 0.000000e+00 : f32
    %84 = vector.shape_cast %40 : vector<64x1xi1> to vector<64x1xi1>
    %85 = vector.broadcast %84 : vector<64x1xi1> to vector<64x16xi1>
    %86 = vector.broadcast %cst_27 : f32 to vector<64x16xf32>
    %87 = arith.select %85, %86, %83 : vector<64x16xi1>, vector<64x16xf32>
    %88 = vector.shape_cast %44 : vector<64x1xi1> to vector<64x1xi1>
    %89 = vector.broadcast %88 : vector<64x1xi1> to vector<64x16xi1>
    %90 = vector.shape_cast %82 : vector<1x16xf32> to vector<1x16xf32>
    %91 = vector.broadcast %90 : vector<1x16xf32> to vector<64x16xf32>
    %92 = arith.select %89, %91, %87 : vector<64x16xi1>, vector<64x16xf32>
    %93 = arith.addf %81, %92 : vector<64x16xf32>
    %94 = arith.mulf %67, %67 : vector<64x16xf32>
    %95 = arith.mulf %93, %93 : vector<64x16xf32>
    %96 = arith.addf %94, %95 : vector<64x16xf32>
    %cst_28 = arith.constant 9.99999997E-7 : f32
    %97 = vector.broadcast %cst_28 : f32 to vector<64x16xf32>
    %98 = arith.addf %96, %97 : vector<64x16xf32>
    %99 = math.sqrt %98 : vector<64x16xf32>
    %c0_29 = arith.constant 0 : index
    %c0_30 = arith.constant 0 : index
    %100 = vector.load %arg4[%c0_29, %c0_30] : memref<64x16xf32, #tpu.memory_space<vmem>>, vector<64x16xf32>
    tpu.vector_store %arg4[%c0_29, %c0_30], %99 {strides = array<i32>} : memref<64x16xf32, #tpu.memory_space<vmem>>, vector<64x16xf32>,
    return
  }
  func.func @transform_0(%arg0: i32) -> (i32, i32) {
    %c0_i32 = arith.constant 0 : i32
    %c0_i32_0 = arith.constant 0 : i32
    return %arg0, %c0_i32 : i32, i32
  }
  func.func @transform_1(%arg0: i32) -> (i32, i32, i32) {
    %c0_i32 = arith.constant 0 : i32
    %c0_i32_0 = arith.constant 0 : i32
    %c0_i32_1 = arith.constant 0 : i32
    return %arg0, %c0_i32, %c0_i32_0 : i32, i32, i32
  }
  func.func @transform_2(%arg0: i32) -> (i32, i32) {
    %c0_i32 = arith.constant 0 : i32
    %c0_i32_0 = arith.constant 0 : i32
    return %arg0, %c0_i32 : i32, i32
  }
  func.func @transform_3(%arg0: i32) -> (i32, i32) {
    %c0_i32 = arith.constant 0 : i32
    %c0_i32_0 = arith.constant 0 : i32
    return %arg0, %c0_i32 : i32, i32
  }
}

</mosaic_0001>

<llo_original>
// kernel: tpu_custom_call.1
$region0: #{tpu_custom_call.1}
  #allocation0 [shape = 'u32[]', space=smem, size = 0x4, offset = 0x4, fixed_abs, tag = 'smem constant byte address 0x4 - core index']
  #allocation1 [shape = 'u32[144,128]{1,0:T(1,128)}', space=vmem, size = 0x12000, scoped, tag = 'internal scratch']
  %s0 = inlined_call_operand.vmem [shape: f32[128,16], index: 0, kind: input, shape index: {}]
  %s1 = inlined_call_operand.vmem [shape: f32[2,2,16], index: 1, kind: input, shape index: {}]
  %s2 = inlined_call_operand.vmem [shape: s32[128,1], index: 2, kind: input, shape index: {}]
  %s3 = inlined_call_operand.vmem [shape: f32[128,16], index: 3, kind: output, shape index: {}]
  %s4 = sld [smem:[#allocation0]]
  $region45: #{tpu_custom_call.1} parent=0
    _
  %s6 = ssub.s32 1, %s4
  %s7 = scalar_select 0, %s6, %s4
  loop: start=0, step=1, limit=4
  $region2: #{tpu_custom_call.1} parent=0 // loop_pre_header
    _
  $region3: #{tpu_custom_call.1} parent=0 // loop_header
    %s9 = sphi 0, %s13
    %p10 = scmp.ge.s32.totalorder %s9, 4
    %s19 = sphi 0, %s21
    %s22 = sphi 0, %s19
    %s23 = sphi 0, %s22
    %s39 = sphi 0, %s23
    %s45 = sphi 0, %s47
    %s48 = sphi 0, %s45
    %s49 = sphi 0, %s48
    %s65 = sphi 0, %s49
    %s71 = sphi 0, %s73
    %s74 = sphi 0, %s71
    %s75 = sphi 0, %s74
    %s91 = sphi 0, %s75
    %s97 = sphi 0, %s99
    %s100 = sphi 0, %s97
    %s101 = sphi 0, %s100
    %s117 = sphi 0, %s101
  $region4: #{tpu_custom_call.1} parent=0 // loop_header_branch
    %12 = sbr.rel (%p10) target = $region8
  $region5: #{tpu_custom_call.1} parent=0 // loop_body
    %s14 = ssub.s32 %s9, 1
    %s15 = ssub.s32 %s9, 2
    %s16 = sadd.s32 %s9, 1
    %s17 = ssub.s32 %s9, %s16
    %p18 = scmp.eq.s32.totalorder %s17, 0
    %s20 = sadd.s32 %s19, 1
    %s21 = scalar_select %p18, %s19, %s20
    %p24 = pneg %p18
    %p25 = scmp.eq.s32.totalorder %s9, 1
    %p26 = por %p24, %p25
    %p27 = scmp.ne.s32.totalorder %s19, %s22
    %p28 = scmp.eq.s32.totalorder %s9, 0
    %p29 = por %p27, %p28
    %p30 = scmp.ne.s32.totalorder %s19, %s22
    %p31 = scmp.eq.s32.totalorder %s14, 1
    %p32 = por %p30, %p31
    %p33 = scmp.ne.s32.totalorder %s22, %s23
    %p34 = scmp.eq.s32.totalorder %s14, 0
    %p35 = por %p33, %p34
    %p36 = scmp.ne.s32.totalorder %s22, %s23
    %p37 = scmp.eq.s32.totalorder %s15, 1
    %p38 = por %p36, %p37
    %p40 = scmp.ne.s32.totalorder %s23, %s39
    %p41 = scmp.eq.s32.totalorder %s15, 0
    %p42 = por %p40, %p41
    %s43 = ssub.s32 %s9, %s16
    %p44 = scmp.eq.s32.totalorder %s43, 0
    %s46 = sadd.s32 %s45, 1
    %s47 = scalar_select %p44, %s45, %s46
    %p50 = pneg %p44
    %p51 = scmp.eq.s32.totalorder %s9, 1
    %p52 = por %p50, %p51
    %p53 = scmp.ne.s32.totalorder %s45, %s48
    %p54 = scmp.eq.s32.totalorder %s9, 0
    %p55 = por %p53, %p54
    %p56 = scmp.ne.s32.totalorder %s45, %s48
    %p57 = scmp.eq.s32.totalorder %s14, 1
    %p58 = por %p56, %p57
    %p59 = scmp.ne.s32.totalorder %s48, %s49
    %p60 = scmp.eq.s32.totalorder %s14, 0
    %p61 = por %p59, %p60
    %p62 = scmp.ne.s32.totalorder %s48, %s49
    %p63 = scmp.eq.s32.totalorder %s15, 1
    %p64 = por %p62, %p63
    %p66 = scmp.ne.s32.totalorder %s49, %s65
    %p67 = scmp.eq.s32.totalorder %s15, 0
    %p68 = por %p66, %p67
    %s69 = ssub.s32 %s9, %s16
    %p70 = scmp.eq.s32.totalorder %s69, 0
    %s72 = sadd.s32 %s71, 1
    %s73 = scalar_select %p70, %s71, %s72
    %p76 = pneg %p70
    %p77 = scmp.eq.s32.totalorder %s9, 1
    %p78 = por %p76, %p77
    %p79 = scmp.ne.s32.totalorder %s71, %s74
    %p80 = scmp.eq.s32.totalorder %s9, 0
    %p81 = por %p79, %p80
    %p82 = scmp.ne.s32.totalorder %s71, %s74
    %p83 = scmp.eq.s32.totalorder %s14, 1
    %p84 = por %p82, %p83
    %p85 = scmp.ne.s32.totalorder %s74, %s75
    %p86 = scmp.eq.s32.totalorder %s14, 0
    %p87 = por %p85, %p86
    %p88 = scmp.ne.s32.totalorder %s74, %s75
    %p89 = scmp.eq.s32.totalorder %s15, 1
    %p90 = por %p88, %p89
    %p92 = scmp.ne.s32.totalorder %s75, %s91
    %p93 = scmp.eq.s32.totalorder %s15, 0
    %p94 = por %p92, %p93
    %s95 = ssub.s32 %s9, %s16
    %p96 = scmp.eq.s32.totalorder %s95, 0
    %s98 = sadd.s32 %s97, 1
    %s99 = scalar_select %p96, %s97, %s98
    %p102 = pneg %p96
    %p103 = scmp.eq.s32.totalorder %s9, 1
    %p104 = por %p102, %p103
    %p105 = scmp.ne.s32.totalorder %s97, %s100
    %p106 = scmp.eq.s32.totalorder %s9, 0
    %p107 = por %p105, %p106
    %p108 = scmp.ne.s32.totalorder %s97, %s100
    %p109 = scmp.eq.s32.totalorder %s14, 1
    %p110 = por %p108, %p109
    %p111 = scmp.ne.s32.totalorder %s100, %s101
    %p112 = scmp.eq.s32.totalorder %s14, 0
    %p113 = por %p111, %p112
    %p114 = scmp.ne.s32.totalorder %s100, %s101
    %p115 = scmp.eq.s32.totalorder %s15, 1
    %p116 = por %p114, %p115
    %p118 = scmp.ne.s32.totalorder %s101, %s117
    %p119 = scmp.eq.s32.totalorder %s15, 0
    %p120 = por %p118, %p119
    %p121 = scmp.le.s32.totalorder 1, %s9
    %p122 = scmp.lt.s32.totalorder %s9, 3
    %p123 = pnand %p121, %p122
    %p124 = pneg %p123
    // Predicated region
    $region9: #{tpu_custom_call.1} parent=5 // pred_check
      _
    $region10: #{tpu_custom_call.1} parent=5 // pred_check_branch
      %126 = sbr.rel (%p123) target = $region12
    $region11: #{tpu_custom_call.1} parent=5 // pred_region
      %s127 = ssub.s32 %s9, 1
    $region12: #{tpu_custom_call.1} parent=5 // pred_fallthru
      _
    %p128 = scmp.lt.s32.totalorder %s9, 2
    // Predicated region
    $region13: #{tpu_custom_call.1} parent=5 // pred_check
      %p129 = pneg %p128
    $region14: #{tpu_custom_call.1} parent=5 // pred_check_branch
      %131 = sbr.rel (%p129) target = $region16
    $region15: #{tpu_custom_call.1} parent=5 // pred_region
      // Predicated region
      $region17: #{tpu_custom_call.1} parent=15 // pred_check
        %p132 = pneg %p29
      $region18: #{tpu_custom_call.1} parent=15 // pred_check_branch
        %134 = sbr.rel (%p132) target = $region20
      $region19: #{tpu_custom_call.1} parent=15 // pred_region
        %s135 = smul.u32 8, %s9
        %p136 = scmp.lt.s32.totalorder %s135, 15
        %s137 = scalar_select %p136, %s135, 15
        %s138 = smul.addr %s137, 8
        %s139 = scalar_lea.vmem %s0, %s138
        %s140 = smul.u32 8, %s9
      $region20: #{tpu_custom_call.1} parent=15 // pred_fallthru
        _
      // Predicated region
      $region21: #{tpu_custom_call.1} parent=15 // pred_check
        %p141 = pneg %p55
      $region22: #{tpu_custom_call.1} parent=15 // pred_check_branch
        %143 = sbr.rel (%p141) target = $region24
      $region23: #{tpu_custom_call.1} parent=15 // pred_region
        %p144 = scmp.lt.s32.totalorder %s9, 1
        %s145 = scalar_select %p144, %s9, 1
        %s146 = smul.addr %s145, 2
        %s147 = scalar_lea.vmem %s1, %s146
      $region24: #{tpu_custom_call.1} parent=15 // pred_fallthru
        _
      // Predicated region
      $region25: #{tpu_custom_call.1} parent=15 // pred_check
        %p148 = pneg %p81
      $region26: #{tpu_custom_call.1} parent=15 // pred_check_branch
        %150 = sbr.rel (%p148) target = $region28
      $region27: #{tpu_custom_call.1} parent=15 // pred_region
        %s151 = smul.u32 8, %s9
        %p152 = scmp.lt.s32.totalorder %s151, 15
        %s153 = scalar_select %p152, %s151, 15
        %s154 = smul.addr %s153, 8
        %s155 = scalar_lea.vmem %s2, %s154
        %s156 = smul.u32 8, %s9
      $region28: #{tpu_custom_call.1} parent=15 // pred_fallthru
        _
    $region16: #{tpu_custom_call.1} parent=5 // pred_fallthru
      _
    %p157 = scmp.le.s32.totalorder 1, %s9
    %p158 = scmp.lt.s32.totalorder %s9, 3
    %p159 = pnand %p157, %p158
    %p160 = pneg %p159
    // Predicated region
    $region29: #{tpu_custom_call.1} parent=5 // pred_check
      _
    $region30: #{tpu_custom_call.1} parent=5 // pred_check_branch
      %162 = sbr.rel (%p159) target = $region32
    $region31: #{tpu_custom_call.1} parent=5 // pred_region
      %s163 = ssub.s32 %s9, 1
      %s164 = smul.u32 8, %s14
      %p165 = scmp.lt.s32.totalorder %s164, 15
      %s166 = scalar_select %p165, %s164, 15
      %s167 = smul.addr %s166, 8
      %s168 = scalar_lea.vmem %s0, %s167
      %p169 = pneg %p35
      %p170 = pneg %p32
      %p171 = scmp.lt.s32.totalorder %s14, 1
      %s172 = scalar_select %p171, %s14, 1
      %s173 = smul.addr %s172, 2
      %s174 = scalar_lea.vmem %s1, %s173
      %p175 = pneg %p61
      %p176 = pneg %p58
      %s177 = smul.u32 8, %s14
      %p178 = scmp.lt.s32.totalorder %s177, 15
      %s179 = scalar_select %p178, %s177, 15
      %s180 = smul.addr %s179, 8
      %s181 = scalar_lea.vmem %s2, %s180
      %p182 = pneg %p87
      %p183 = pneg %p84
      %p184 = pneg %p113
      %p185 = pneg %p110
      %s186 = smul.u32 8, %s14
      %p187 = scmp.lt.s32.totalorder %s186, 15
      %s188 = scalar_select %p187, %s186, 15
      %s189 = smul.addr %s188, 8
      %s190 = scalar_lea.vmem %s3, %s189
      %s191 = smul.u32 8, %s14
      %p192 = scmp.lt.s32.totalorder %s191, 15
      %s193 = scalar_select %p192, %s191, 15
      %s194 = smul.addr %s193, 8
      %s195 = scalar_lea.vmem %s0, %s194
      %s196 = smul.u32 8, %s14
      %p197 = scmp.lt.s32.totalorder %s14, 1
      %s198 = scalar_select %p197, %s14, 1
      %s199 = smul.addr %s198, 2
      %s200 = scalar_lea.vmem %s1, %s199
      %s201 = smul.u32 8, %s14
      %p202 = scmp.lt.s32.totalorder %s201, 15
      %s203 = scalar_select %p202, %s201, 15
      %s204 = smul.addr %s203, 8
      %s205 = scalar_lea.vmem %s2, %s204
      %s206 = smul.u32 8, %s14
      %s207 = smul.u32 8, %s14
      %p208 = scmp.lt.s32.totalorder %s207, 15
      %s209 = scalar_select %p208, %s207, 15
      %s210 = smul.addr %s209, 8
      %s211 = scalar_lea.vmem %s3, %s210
      %s212 = smul.u32 8, %s14
      %v213 = vld [vmem:[%s195] sm:$0xff]
      %v214 = vld [vmem:[%s195 + $0x8] sm:$0xff]
      %v215 = vld [vmem:[%s195 + $0x10] sm:$0xff]
      %v216 = vld [vmem:[%s195 + $0x18] sm:$0xff]
      %v217 = vld [vmem:[%s195 + $0x20] sm:$0xff]
      %v218 = vld [vmem:[%s195 + $0x28] sm:$0xff]
      %v219 = vld [vmem:[%s195 + $0x30] sm:$0xff]
      %v220 = vld [vmem:[%s195 + $0x38] sm:$0xff]
      %v221 = vld [vmem:[%s200] sm:$0x3]
      %v222 = vld [vmem:[%s205] sm:$0xff]
      %v223 = vld [vmem:[%s205 + $0x8] sm:$0xff]
      %v224 = vld [vmem:[%s205 + $0x10] sm:$0xff]
      %v225 = vld [vmem:[%s205 + $0x18] sm:$0xff]
      %v226 = vld [vmem:[%s205 + $0x20] sm:$0xff]
      %v227 = vld [vmem:[%s205 + $0x28] sm:$0xff]
      %v228 = vld [vmem:[%s205 + $0x30] sm:$0xff]
      %v229 = vld [vmem:[%s205 + $0x38] sm:$0xff]
      %v230 = vlaneseq
      %v231 = vand.u32 %v230, 127
      %vm232 = vcmp.eq.s32.totalorder %v231, 0
      %vm233 = vcmask 1047680
      %234 = vrot.lane.b32.xlu0 %v213, 16
      %v235 = vpop.permute.xlu0 %234
      %v236 = vsel %vm233, %v235, %v213
      %237 = vrot.lane.b32.xlu0 %v214, 16
      %v238 = vpop.permute.xlu0 %237
      %v239 = vsel %vm233, %v238, %v214
      %240 = vrot.lane.b32.xlu0 %v215, 16
      %v241 = vpop.permute.xlu0 %240
      %v242 = vsel %vm233, %v241, %v215
      %243 = vrot.lane.b32.xlu0 %v216, 16
      %v244 = vpop.permute.xlu0 %243
      %v245 = vsel %vm233, %v244, %v216
      %246 = vrot.lane.b32.xlu0 %v217, 16
      %v247 = vpop.permute.xlu0 %246
      %v248 = vsel %vm233, %v247, %v217
      %249 = vrot.lane.b32.xlu0 %v218, 16
      %v250 = vpop.permute.xlu0 %249
      %v251 = vsel %vm233, %v250, %v218
      %252 = vrot.lane.b32.xlu0 %v219, 16
      %v253 = vpop.permute.xlu0 %252
      %v254 = vsel %vm233, %v253, %v219
      %255 = vrot.lane.b32.xlu0 %v220, 16
      %v256 = vpop.permute.xlu0 %255
      %v257 = vsel %vm233, %v256, %v220
      %258 = vrot.lane.b32.xlu0 %v236, 16
      %v259 = vpop.permute.xlu0 %258
      %260 = vrot.lane.b32.xlu0 %v239, 16
      %v261 = vpop.permute.xlu0 %260
      %262 = vrot.lane.b32.xlu0 %v242, 16
      %v263 = vpop.permute.xlu0 %262
      %264 = vrot.lane.b32.xlu0 %v245, 16
      %v265 = vpop.permute.xlu0 %264
      %266 = vrot.lane.b32.xlu0 %v248, 16
      %v267 = vpop.permute.xlu0 %266
      %268 = vrot.lane.b32.xlu0 %v251, 16
      %v269 = vpop.permute.xlu0 %268
      %270 = vrot.lane.b32.xlu0 %v254, 16
      %v271 = vpop.permute.xlu0 %270
      %272 = vrot.lane.b32.xlu0 %v257, 16
      %v273 = vpop.permute.xlu0 %272
      %v274 = vsel %vm233, %v259, %v213
      %v275 = vsel %vm233, %v261, %v214
      %v276 = vsel %vm233, %v263, %v215
      %v277 = vsel %vm233, %v265, %v216
      %v278 = vsel %vm233, %v267, %v217
      %v279 = vsel %vm233, %v269, %v218
      %v280 = vsel %vm233, %v271, %v219
      %v281 = vsel %vm233, %v273, %v220
      %290 = vrot.lane.b32.xlu0 %v274, 113
      %v291 = vpop.permute.xlu0 %290
      %292 = vrot.lane.b32.xlu0 %v275, 113
      %v293 = vpop.permute.xlu0 %292
      %294 = vrot.lane.b32.xlu0 %v276, 113
      %v295 = vpop.permute.xlu0 %294
      %296 = vrot.lane.b32.xlu0 %v277, 113
      %v297 = vpop.permute.xlu0 %296
      %298 = vrot.lane.b32.xlu0 %v278, 113
      %v299 = vpop.permute.xlu0 %298
      %300 = vrot.lane.b32.xlu0 %v279, 113
      %v301 = vpop.permute.xlu0 %300
      %302 = vrot.lane.b32.xlu0 %v280, 113
      %v303 = vpop.permute.xlu0 %302
      %304 = vrot.lane.b32.xlu0 %v281, 113
      %v305 = vpop.permute.xlu0 %304
      %v314 = vsel %vm232, 0.0, %v291
      %v315 = vsel %vm232, 0.0, %v293
      %v316 = vsel %vm232, 0.0, %v295
      %v317 = vsel %vm232, 0.0, %v297
      %v318 = vsel %vm232, 0.0, %v299
      %v319 = vsel %vm232, 0.0, %v301
      %v320 = vsel %vm232, 0.0, %v303
      %v321 = vsel %vm232, 0.0, %v305
      %vm322 = vcmp.eq.s32.totalorder %v231, 15
      %323 = vrot.lane.b32.xlu0 %v274, 127
      %v324 = vpop.permute.xlu0 %323
      %325 = vrot.lane.b32.xlu0 %v275, 127
      %v326 = vpop.permute.xlu0 %325
      %327 = vrot.lane.b32.xlu0 %v276, 127
      %v328 = vpop.permute.xlu0 %327
      %329 = vrot.lane.b32.xlu0 %v277, 127
      %v330 = vpop.permute.xlu0 %329
      %331 = vrot.lane.b32.xlu0 %v278, 127
      %v332 = vpop.permute.xlu0 %331
      %333 = vrot.lane.b32.xlu0 %v279, 127
      %v334 = vpop.permute.xlu0 %333
      %335 = vrot.lane.b32.xlu0 %v280, 127
      %v336 = vpop.permute.xlu0 %335
      %337 = vrot.lane.b32.xlu0 %v281, 127
      %v338 = vpop.permute.xlu0 %337
      %v347 = vsel %vm322, 0.0, %v324
      %v348 = vsel %vm322, 0.0, %v326
      %v349 = vsel %vm322, 0.0, %v328
      %v350 = vsel %vm322, 0.0, %v330
      %v351 = vsel %vm322, 0.0, %v332
      %v352 = vsel %vm322, 0.0, %v334
      %v353 = vsel %vm322, 0.0, %v336
      %v354 = vsel %vm322, 0.0, %v338
      %v355 = vmul.f32 %v213, 2.0
      %v356 = vmul.f32 %v214, 2.0
      %v357 = vmul.f32 %v215, 2.0
      %v358 = vmul.f32 %v216, 2.0
      %v359 = vmul.f32 %v217, 2.0
      %v360 = vmul.f32 %v218, 2.0
      %v361 = vmul.f32 %v219, 2.0
      %v362 = vmul.f32 %v220, 2.0
      %v363 = vadd.f32 %v314, %v355
      %v364 = vadd.f32 %v315, %v356
      %v365 = vadd.f32 %v316, %v357
      %v366 = vadd.f32 %v317, %v358
      %v367 = vadd.f32 %v318, %v359
      %v368 = vadd.f32 %v319, %v360
      %v369 = vadd.f32 %v320, %v361
      %v370 = vadd.f32 %v321, %v362
      %v371 = vadd.f32 %v363, %v347
      %v372 = vadd.f32 %v364, %v348
      %v373 = vadd.f32 %v365, %v349
      %v374 = vadd.f32 %v366, %v350
      %v375 = vadd.f32 %v367, %v351
      %v376 = vadd.f32 %v368, %v352
      %v377 = vadd.f32 %v369, %v353
      %v378 = vadd.f32 %v370, %v354
      %v379 = vsub.f32 %v347, %v314
      %v380 = vsub.f32 %v348, %v315
      %v381 = vsub.f32 %v349, %v316
      %v382 = vsub.f32 %v350, %v317
      %v383 = vsub.f32 %v351, %v318
      %v384 = vsub.f32 %v352, %v319
      %v385 = vsub.f32 %v353, %v320
      %v386 = vsub.f32 %v354, %v321
      %387 = vrot.lane.b32.xlu0 %v221, 16
      %v388 = vpop.permute.xlu0 %387
      %v389 = vsel %vm233, %v388, %v221
      %390 = vrot.lane.b32.xlu0 %v389, 16
      %v391 = vpop.permute.xlu0 %390
      %v392 = vsel %vm233, %v391, %v221
      %394 = vrot.lane.b32.xlu0 %v392, 113
      %v395 = vpop.permute.xlu0 %394
      %v397 = vsel %vm232, 0.0, %v395
      %398 = vrot.lane.b32.xlu0 %v392, 127
      %v399 = vpop.permute.xlu0 %398
      %v401 = vsel %vm322, 0.0, %v399
      %v402 = vmul.f32 %v221, 2.0
      %v403 = vadd.f32 %v397, %v402
      %v404 = vadd.f32 %v403, %v401
      %v405 = vsub.f32 %v401, %v397
      %v406 = vlaneseq
      %v407 = vshrl.u32 %v406, 7
      %v408 = vadd.s32 %v407, 8
      %v409 = vadd.s32 %v407, 16
      %v410 = vadd.s32 %v407, 24
      %v411 = vadd.s32 %v407, 32
      %v412 = vadd.s32 %v407, 40
      %v413 = vadd.s32 %v407, 48
      %v414 = vadd.s32 %v407, 56
      %vm415 = vcmp.eq.s32.totalorder %v222, 0
      %vm416 = vcmp.eq.s32.totalorder %v223, 0
      %vm417 = vcmp.eq.s32.totalorder %v224, 0
      %vm418 = vcmp.eq.s32.totalorder %v225, 0
      %vm419 = vcmp.eq.s32.totalorder %v226, 0
      %vm420 = vcmp.eq.s32.totalorder %v227, 0
      %vm421 = vcmp.eq.s32.totalorder %v228, 0
      %vm422 = vcmp.eq.s32.totalorder %v229, 0
      %vm423 = vcmp.eq.s32.totalorder %v222, 15
      %vm424 = vcmp.eq.s32.totalorder %v223, 15
      %vm425 = vcmp.eq.s32.totalorder %v224, 15
      %vm426 = vcmp.eq.s32.totalorder %v225, 15
      %vm427 = vcmp.eq.s32.totalorder %v226, 15
      %vm428 = vcmp.eq.s32.totalorder %v227, 15
      %vm429 = vcmp.eq.s32.totalorder %v228, 15
      %vm430 = vcmp.eq.s32.totalorder %v229, 15
      %vm431 = vcmp.eq.s32.totalorder %v407, 0
      %vm432 = vcmp.eq.s32.totalorder %v408, 0
      %vm433 = vcmp.eq.s32.totalorder %v409, 0
      %vm434 = vcmp.eq.s32.totalorder %v410, 0
      %vm435 = vcmp.eq.s32.totalorder %v411, 0
      %vm436 = vcmp.eq.s32.totalorder %v412, 0
      %vm437 = vcmp.eq.s32.totalorder %v413, 0
      %vm438 = vcmp.eq.s32.totalorder %v414, 0
      %vm439 = vcmp.eq.s32.totalorder %v407, 63
      %vm440 = vcmp.eq.s32.totalorder %v408, 63
      %vm441 = vcmp.eq.s32.totalorder %v409, 63
      %vm442 = vcmp.eq.s32.totalorder %v410, 63
      %vm443 = vcmp.eq.s32.totalorder %v411, 63
      %vm444 = vcmp.eq.s32.totalorder %v412, 63
      %vm445 = vcmp.eq.s32.totalorder %v413, 63
      %vm446 = vcmp.eq.s32.totalorder %v414, 63
      %v447 = vrot.slane %v371, 1
      %v448 = vrot.slane %v372, 1
      %v449 = vrot.slane %v373, 1
      %v450 = vrot.slane %v374, 1
      %v451 = vrot.slane %v375, 1
      %v452 = vrot.slane %v376, 1
      %v453 = vrot.slane %v377, 1
      %v454 = vrot.slane %v378, 1
      %vm455 = vcmp.lt.s32.totalorder %v407, 7
      %v456 = vsel %vm455, %v453, %v454
      %v457 = vsel %vm455, %v452, %v453
      %v458 = vsel %vm455, %v451, %v452
      %v459 = vsel %vm455, %v450, %v451
      %v460 = vsel %vm455, %v449, %v450
      %v461 = vsel %vm455, %v448, %v449
      %v462 = vsel %vm455, %v447, %v448
      %v463 = vsel %vm455, %v454, %v447
      %v464 = vsel %vm423, 1, 0
      %v465 = vsel %vm424, 1, 0
      %v466 = vsel %vm425, 1, 0
      %v467 = vsel %vm426, 1, 0
      %v468 = vsel %vm427, 1, 0
      %v469 = vsel %vm428, 1, 0
      %v470 = vsel %vm429, 1, 0
      %v471 = vsel %vm430, 1, 0
      %472 = vset.pattern.permute.xlu0 0
      %473 = vperm.xlu0 %472, %v464
      %v474 = vpop.permute.xlu0 %473
      %475 = vset.pattern.permute.xlu0 0
      %476 = vperm.xlu0 %475, %v465
      %v477 = vpop.permute.xlu0 %476
      %478 = vset.pattern.permute.xlu0 0
      %479 = vperm.xlu0 %478, %v466
      %v480 = vpop.permute.xlu0 %479
      %481 = vset.pattern.permute.xlu0 0
      %482 = vperm.xlu0 %481, %v467
      %v483 = vpop.permute.xlu0 %482
      %484 = vset.pattern.permute.xlu0 0
      %485 = vperm.xlu0 %484, %v468
      %v486 = vpop.permute.xlu0 %485
      %487 = vset.pattern.permute.xlu0 0
      %488 = vperm.xlu0 %487, %v469
      %v489 = vpop.permute.xlu0 %488
      %490 = vset.pattern.permute.xlu0 0
      %491 = vperm.xlu0 %490, %v470
      %v492 = vpop.permute.xlu0 %491
      %493 = vset.pattern.permute.xlu0 0
      %494 = vperm.xlu0 %493, %v471
      %v495 = vpop.permute.xlu0 %494
      %vm496 = vcmp.eq.s32.totalorder %v474, 1
      %vm497 = vcmp.eq.s32.totalorder %v477, 1
      %vm498 = vcmp.eq.s32.totalorder %v480, 1
      %vm499 = vcmp.eq.s32.totalorder %v483, 1
      %vm500 = vcmp.eq.s32.totalorder %v486, 1
      %vm501 = vcmp.eq.s32.totalorder %v489, 1
      %vm502 = vcmp.eq.s32.totalorder %v492, 1
      %vm503 = vcmp.eq.s32.totalorder %v495, 1
      %v504 = vsel %vm496, 0.0, %v462
      %v505 = vsel %vm497, 0.0, %v461
      %v506 = vsel %vm498, 0.0, %v460
      %v507 = vsel %vm499, 0.0, %v459
      %v508 = vsel %vm500, 0.0, %v458
      %v509 = vsel %vm501, 0.0, %v457
      %v510 = vsel %vm502, 0.0, %v456
      %v511 = vsel %vm503, 0.0, %v463
      %v512 = vsel %vm439, 1, 0
      %v513 = vsel %vm440, 1, 0
      %v514 = vsel %vm441, 1, 0
      %v515 = vsel %vm442, 1, 0
      %v516 = vsel %vm443, 1, 0
      %v517 = vsel %vm444, 1, 0
      %v518 = vsel %vm445, 1, 0
      %v519 = vsel %vm446, 1, 0
      %vm520 = vcmp.eq.s32.totalorder %v512, 1
      %vm521 = vcmp.eq.s32.totalorder %v513, 1
      %vm522 = vcmp.eq.s32.totalorder %v514, 1
      %vm523 = vcmp.eq.s32.totalorder %v515, 1
      %vm524 = vcmp.eq.s32.totalorder %v516, 1
      %vm525 = vcmp.eq.s32.totalorder %v517, 1
      %vm526 = vcmp.eq.s32.totalorder %v518, 1
      %vm527 = vcmp.eq.s32.totalorder %v519, 1
      %v528 = vlaneseq
      %v529 = vshrl.u32 %v528, 7
      %v530 = vsub.s32 1, %v529
      %v531 = vrot.slane %v404, %v530
      %v532 = vsel %vm520, %v531, %v504
      %v533 = vsel %vm521, %v531, %v505
      %v534 = vsel %vm522, %v531, %v506
      %v535 = vsel %vm523, %v531, %v507
      %v536 = vsel %vm524, %v531, %v508
      %v537 = vsel %vm525, %v531, %v509
      %v538 = vsel %vm526, %v531, %v510
      %v539 = vsel %vm527, %v531, %v511
      %v540 = vrot.slane %v371, 7
      %v541 = vrot.slane %v372, 7
      %v542 = vrot.slane %v373, 7
      %v543 = vrot.slane %v374, 7
      %v544 = vrot.slane %v375, 7
      %v545 = vrot.slane %v376, 7
      %v546 = vrot.slane %v377, 7
      %v547 = vrot.slane %v378, 7
      %vm548 = vcmp.lt.s32.totalorder %v407, 1
      %v549 = vsel %vm548, %v546, %v547
      %v550 = vsel %vm548, %v545, %v546
      %v551 = vsel %vm548, %v544, %v545
      %v552 = vsel %vm548, %v543, %v544
      %v553 = vsel %vm548, %v542, %v543
      %v554 = vsel %vm548, %v541, %v542
      %v555 = vsel %vm548, %v540, %v541
      %v556 = vsel %vm548, %v547, %v540
      %v557 = vsel %vm415, 1, 0
      %v558 = vsel %vm416, 1, 0
      %v559 = vsel %vm417, 1, 0
      %v560 = vsel %vm418, 1, 0
      %v561 = vsel %vm419, 1, 0
      %v562 = vsel %vm420, 1, 0
      %v563 = vsel %vm421, 1, 0
      %v564 = vsel %vm422, 1, 0
      %565 = vset.pattern.permute.xlu0 0
      %566 = vperm.xlu0 %565, %v557
      %v567 = vpop.permute.xlu0 %566
      %568 = vset.pattern.permute.xlu0 0
      %569 = vperm.xlu0 %568, %v558
      %v570 = vpop.permute.xlu0 %569
      %571 = vset.pattern.permute.xlu0 0
      %572 = vperm.xlu0 %571, %v559
      %v573 = vpop.permute.xlu0 %572
      %574 = vset.pattern.permute.xlu0 0
      %575 = vperm.xlu0 %574, %v560
      %v576 = vpop.permute.xlu0 %575
      %577 = vset.pattern.permute.xlu0 0
      %578 = vperm.xlu0 %577, %v561
      %v579 = vpop.permute.xlu0 %578
      %580 = vset.pattern.permute.xlu0 0
      %581 = vperm.xlu0 %580, %v562
      %v582 = vpop.permute.xlu0 %581
      %583 = vset.pattern.permute.xlu0 0
      %584 = vperm.xlu0 %583, %v563
      %v585 = vpop.permute.xlu0 %584
      %586 = vset.pattern.permute.xlu0 0
      %587 = vperm.xlu0 %586, %v564
      %v588 = vpop.permute.xlu0 %587
      %vm589 = vcmp.eq.s32.totalorder %v567, 1
      %vm590 = vcmp.eq.s32.totalorder %v570, 1
      %vm591 = vcmp.eq.s32.totalorder %v573, 1
      %vm592 = vcmp.eq.s32.totalorder %v576, 1
      %vm593 = vcmp.eq.s32.totalorder %v579, 1
      %vm594 = vcmp.eq.s32.totalorder %v582, 1
      %vm595 = vcmp.eq.s32.totalorder %v585, 1
      %vm596 = vcmp.eq.s32.totalorder %v588, 1
      %v597 = vsel %vm589, 0.0, %v556
      %v598 = vsel %vm590, 0.0, %v555
      %v599 = vsel %vm591, 0.0, %v554
      %v600 = vsel %vm592, 0.0, %v553
      %v601 = vsel %vm593, 0.0, %v552
      %v602 = vsel %vm594, 0.0, %v551
      %v603 = vsel %vm595, 0.0, %v550
      %v604 = vsel %vm596, 0.0, %v549
      %v605 = vsel %vm431, 1, 0
      %v606 = vsel %vm432, 1, 0
      %v607 = vsel %vm433, 1, 0
      %v608 = vsel %vm434, 1, 0
      %v609 = vsel %vm435, 1, 0
      %v610 = vsel %vm436, 1, 0
      %v611 = vsel %vm437, 1, 0
      %v612 = vsel %vm438, 1, 0
      %vm613 = vcmp.eq.s32.totalorder %v605, 1
      %vm614 = vcmp.eq.s32.totalorder %v606, 1
      %vm615 = vcmp.eq.s32.totalorder %v607, 1
      %vm616 = vcmp.eq.s32.totalorder %v608, 1
      %vm617 = vcmp.eq.s32.totalorder %v609, 1
      %vm618 = vcmp.eq.s32.totalorder %v610, 1
      %vm619 = vcmp.eq.s32.totalorder %v611, 1
      %vm620 = vcmp.eq.s32.totalorder %v612, 1
      %v621 = vlaneseq
      %v622 = vshrl.u32 %v621, 7
      %v623 = vsub.s32 0, %v622
      %v624 = vrot.slane %v404, %v623
      %v625 = vsel %vm613, %v624, %v597
      %v626 = vsel %vm614, %v624, %v598
      %v627 = vsel %vm615, %v624, %v599
      %v628 = vsel %vm616, %v624, %v600
      %v629 = vsel %vm617, %v624, %v601
      %v630 = vsel %vm618, %v624, %v602
      %v631 = vsel %vm619, %v624, %v603
      %v632 = vsel %vm620, %v624, %v604
      %v633 = vsub.f32 %v532, %v625
      %v634 = vsub.f32 %v533, %v626
      %v635 = vsub.f32 %v534, %v627
      %v636 = vsub.f32 %v535, %v628
      %v637 = vsub.f32 %v536, %v629
      %v638 = vsub.f32 %v537, %v630
      %v639 = vsub.f32 %v538, %v631
      %v640 = vsub.f32 %v539, %v632
      %v641 = vrot.slane %v379, 7
      %v642 = vrot.slane %v380, 7
      %v643 = vrot.slane %v381, 7
      %v644 = vrot.slane %v382, 7
      %v645 = vrot.slane %v383, 7
      %v646 = vrot.slane %v384, 7
      %v647 = vrot.slane %v385, 7
      %v648 = vrot.slane %v386, 7
      %v649 = vsel %vm548, %v647, %v648
      %v650 = vsel %vm548, %v646, %v647
      %v651 = vsel %vm548, %v645, %v646
      %v652 = vsel %vm548, %v644, %v645
      %v653 = vsel %vm548, %v643, %v644
      %v654 = vsel %vm548, %v642, %v643
      %v655 = vsel %vm548, %v641, %v642
      %v656 = vsel %vm548, %v648, %v641
      %v657 = vsel %vm589, 0.0, %v656
      %v658 = vsel %vm590, 0.0, %v655
      %v659 = vsel %vm591, 0.0, %v654
      %v660 = vsel %vm592, 0.0, %v653
      %v661 = vsel %vm593, 0.0, %v652
      %v662 = vsel %vm594, 0.0, %v651
      %v663 = vsel %vm595, 0.0, %v650
      %v664 = vsel %vm596, 0.0, %v649
      %v665 = vlaneseq
      %v666 = vshrl.u32 %v665, 7
      %v667 = vsub.s32 0, %v666
      %v668 = vrot.slane %v405, %v667
      %v669 = vsel %vm613, %v668, %v657
      %v670 = vsel %vm614, %v668, %v658
      %v671 = vsel %vm615, %v668, %v659
      %v672 = vsel %vm616, %v668, %v660
      %v673 = vsel %vm617, %v668, %v661
      %v674 = vsel %vm618, %v668, %v662
      %v675 = vsel %vm619, %v668, %v663
      %v676 = vsel %vm620, %v668, %v664
      %v677 = vmul.f32 %v379, 2.0
      %v678 = vmul.f32 %v380, 2.0
      %v679 = vmul.f32 %v381, 2.0
      %v680 = vmul.f32 %v382, 2.0
      %v681 = vmul.f32 %v383, 2.0
      %v682 = vmul.f32 %v384, 2.0
      %v683 = vmul.f32 %v385, 2.0
      %v684 = vmul.f32 %v386, 2.0
      %v685 = vadd.f32 %v669, %v677
      %v686 = vadd.f32 %v670, %v678
      %v687 = vadd.f32 %v671, %v679
      %v688 = vadd.f32 %v672, %v680
      %v689 = vadd.f32 %v673, %v681
      %v690 = vadd.f32 %v674, %v682
      %v691 = vadd.f32 %v675, %v683
      %v692 = vadd.f32 %v676, %v684
      %v693 = vrot.slane %v379, 1
      %v694 = vrot.slane %v380, 1
      %v695 = vrot.slane %v381, 1
      %v696 = vrot.slane %v382, 1
      %v697 = vrot.slane %v383, 1
      %v698 = vrot.slane %v384, 1
      %v699 = vrot.slane %v385, 1
      %v700 = vrot.slane %v386, 1
      %v701 = vsel %vm455, %v699, %v700
      %v702 = vsel %vm455, %v698, %v699
      %v703 = vsel %vm455, %v697, %v698
      %v704 = vsel %vm455, %v696, %v697
      %v705 = vsel %vm455, %v695, %v696
      %v706 = vsel %vm455, %v694, %v695
      %v707 = vsel %vm455, %v693, %v694
      %v708 = vsel %vm455, %v700, %v693
      %v709 = vsel %vm496, 0.0, %v707
      %v710 = vsel %vm497, 0.0, %v706
      %v711 = vsel %vm498, 0.0, %v705
      %v712 = vsel %vm499, 0.0, %v704
      %v713 = vsel %vm500, 0.0, %v703
      %v714 = vsel %vm501, 0.0, %v702
      %v715 = vsel %vm502, 0.0, %v701
      %v716 = vsel %vm503, 0.0, %v708
      %v717 = vlaneseq
      %v718 = vshrl.u32 %v717, 7
      %v719 = vsub.s32 1, %v718
      %v720 = vrot.slane %v405, %v719
      %v721 = vsel %vm520, %v720, %v709
      %v722 = vsel %vm521, %v720, %v710
      %v723 = vsel %vm522, %v720, %v711
      %v724 = vsel %vm523, %v720, %v712
      %v725 = vsel %vm524, %v720, %v713
      %v726 = vsel %vm525, %v720, %v714
      %v727 = vsel %vm526, %v720, %v715
      %v728 = vsel %vm527, %v720, %v716
      %v729 = vadd.f32 %v685, %v721
      %v730 = vadd.f32 %v686, %v722
      %v731 = vadd.f32 %v687, %v723
      %v732 = vadd.f32 %v688, %v724
      %v733 = vadd.f32 %v689, %v725
      %v734 = vadd.f32 %v690, %v726
      %v735 = vadd.f32 %v691, %v727
      %v736 = vadd.f32 %v692, %v728
      %v737 = vmul.f32 %v633, %v633
      %v738 = vmul.f32 %v634, %v634
      %v739 = vmul.f32 %v635, %v635
      %v740 = vmul.f32 %v636, %v636
      %v741 = vmul.f32 %v637, %v637
      %v742 = vmul.f32 %v638, %v638
      %v743 = vmul.f32 %v639, %v639
      %v744 = vmul.f32 %v640, %v640
      %v745 = vmul.f32 %v729, %v729
      %v746 = vmul.f32 %v730, %v730
      %v747 = vmul.f32 %v731, %v731
      %v748 = vmul.f32 %v732, %v732
      %v749 = vmul.f32 %v733, %v733
      %v750 = vmul.f32 %v734, %v734
      %v751 = vmul.f32 %v735, %v735
      %v752 = vmul.f32 %v736, %v736
      %v753 = vadd.f32 %v737, %v745
      %v754 = vadd.f32 %v738, %v746
      %v755 = vadd.f32 %v739, %v747
      %v756 = vadd.f32 %v740, %v748
      %v757 = vadd.f32 %v741, %v749
      %v758 = vadd.f32 %v742, %v750
      %v759 = vadd.f32 %v743, %v751
      %v760 = vadd.f32 %v744, %v752
      %v761 = vadd.f32 %v753, 1e-06
      %v762 = vadd.f32 %v754, 1e-06
      %v763 = vadd.f32 %v755, 1e-06
      %v764 = vadd.f32 %v756, 1e-06
      %v765 = vadd.f32 %v757, 1e-06
      %v766 = vadd.f32 %v758, 1e-06
      %v767 = vadd.f32 %v759, 1e-06
      %v768 = vadd.f32 %v760, 1e-06
      %v769 = vrsqrt.pop %v761
      %v770 = vmul.f32 %v761, %v769
      %vm771 = vcmp.eq.f32.partialorder %v761, inf
      %v772 = vsel %vm771, %v761, %v770
      %vm773 = vcmp.eq.f32.partialorder %v761, 0.0
      %v774 = vand.u32 %v761, 2147483648
      %v775 = vsel %vm773, %v774, %v772
      %v776 = vrsqrt.pop %v762
      %v777 = vmul.f32 %v762, %v776
      %vm778 = vcmp.eq.f32.partialorder %v762, inf
      %v779 = vsel %vm778, %v762, %v777
      %vm780 = vcmp.eq.f32.partialorder %v762, 0.0
      %v781 = vand.u32 %v762, 2147483648
      %v782 = vsel %vm780, %v781, %v779
      %v783 = vrsqrt.pop %v763
      %v784 = vmul.f32 %v763, %v783
      %vm785 = vcmp.eq.f32.partialorder %v763, inf
      %v786 = vsel %vm785, %v763, %v784
      %vm787 = vcmp.eq.f32.partialorder %v763, 0.0
      %v788 = vand.u32 %v763, 2147483648
      %v789 = vsel %vm787, %v788, %v786
      %v790 = vrsqrt.pop %v764
      %v791 = vmul.f32 %v764, %v790
      %vm792 = vcmp.eq.f32.partialorder %v764, inf
      %v793 = vsel %vm792, %v764, %v791
      %vm794 = vcmp.eq.f32.partialorder %v764, 0.0
      %v795 = vand.u32 %v764, 2147483648
      %v796 = vsel %vm794, %v795, %v793
      %v797 = vrsqrt.pop %v765
      %v798 = vmul.f32 %v765, %v797
      %vm799 = vcmp.eq.f32.partialorder %v765, inf
      %v800 = vsel %vm799, %v765, %v798
      %vm801 = vcmp.eq.f32.partialorder %v765, 0.0
      %v802 = vand.u32 %v765, 2147483648
      %v803 = vsel %vm801, %v802, %v800
      %v804 = vrsqrt.pop %v766
      %v805 = vmul.f32 %v766, %v804
      %vm806 = vcmp.eq.f32.partialorder %v766, inf
      %v807 = vsel %vm806, %v766, %v805
      %vm808 = vcmp.eq.f32.partialorder %v766, 0.0
      %v809 = vand.u32 %v766, 2147483648
      %v810 = vsel %vm808, %v809, %v807
      %v811 = vrsqrt.pop %v767
      %v812 = vmul.f32 %v767, %v811
      %vm813 = vcmp.eq.f32.partialorder %v767, inf
      %v814 = vsel %vm813, %v767, %v812
      %vm815 = vcmp.eq.f32.partialorder %v767, 0.0
      %v816 = vand.u32 %v767, 2147483648
      %v817 = vsel %vm815, %v816, %v814
      %v818 = vrsqrt.pop %v768
      %v819 = vmul.f32 %v768, %v818
      %vm820 = vcmp.eq.f32.partialorder %v768, inf
      %v821 = vsel %vm820, %v768, %v819
      %vm822 = vcmp.eq.f32.partialorder %v768, 0.0
      %v823 = vand.u32 %v768, 2147483648
      %v824 = vsel %vm822, %v823, %v821
      %vm825 = vcmask 130048
      %826 = vst.msk [vmem:[%s211] sm:$0xff] %vm825, %v775
      %827 = vst.msk [vmem:[%s211 + $0x8] sm:$0xff] %vm825, %v782
      %828 = vst.msk [vmem:[%s211 + $0x10] sm:$0xff] %vm825, %v789
      %829 = vst.msk [vmem:[%s211 + $0x18] sm:$0xff] %vm825, %v796
      %830 = vst.msk [vmem:[%s211 + $0x20] sm:$0xff] %vm825, %v803
      %831 = vst.msk [vmem:[%s211 + $0x28] sm:$0xff] %vm825, %v810
      %832 = vst.msk [vmem:[%s211 + $0x30] sm:$0xff] %vm825, %v817
      %833 = vst.msk [vmem:[%s211 + $0x38] sm:$0xff] %vm825, %v824
      %s834 = smul.u32 8, %s14
      %p835 = scmp.lt.s32.totalorder %s834, 15
      %s836 = scalar_select %p835, %s834, 15
      %s837 = smul.addr %s836, 8
      %s838 = scalar_lea.vmem %s3, %s837
      // Predicated region
      $region33: #{tpu_custom_call.1} parent=31 // pred_check
        %p839 = pneg %p110
      $region34: #{tpu_custom_call.1} parent=31 // pred_check_branch
        %841 = sbr.rel (%p839) target = $region36
      $region35: #{tpu_custom_call.1} parent=31 // pred_region
        %s842 = smul.u32 8, %s14
      $region36: #{tpu_custom_call.1} parent=31 // pred_fallthru
        _
    $region32: #{tpu_custom_call.1} parent=5 // pred_fallthru
      _
    %p843 = scmp.le.s32.totalorder 2, %s9
    // Predicated region
    $region37: #{tpu_custom_call.1} parent=5 // pred_check
      %p844 = pneg %p843
    $region38: #{tpu_custom_call.1} parent=5 // pred_check_branch
      %846 = sbr.rel (%p844) target = $region40
    $region39: #{tpu_custom_call.1} parent=5 // pred_region
      %s847 = ssub.s32 %s9, 2
      // Predicated region
      $region41: #{tpu_custom_call.1} parent=39 // pred_check
        %p848 = pneg %p116
      $region42: #{tpu_custom_call.1} parent=39 // pred_check_branch
        %850 = sbr.rel (%p848) target = $region44
      $region43: #{tpu_custom_call.1} parent=39 // pred_region
        %s851 = smul.u32 8, %s15
        %p852 = scmp.lt.s32.totalorder %s851, 15
        %s853 = scalar_select %p852, %s851, 15
        %s854 = smul.addr %s853, 8
        %s855 = scalar_lea.vmem %s3, %s854
      $region44: #{tpu_custom_call.1} parent=39 // pred_fallthru
        _
    $region40: #{tpu_custom_call.1} parent=5 // pred_fallthru
      _
  $region6: #{tpu_custom_call.1} parent=0 // loop_footer
    %s13 = sadd.s32 1, %s9
  $region7: #{tpu_custom_call.1} parent=0 // loop_footer_branch
    %8 = sbr.rel target = $region3
  $region8: #{tpu_custom_call.1} parent=0 // loop_exit
    _

</llo_original>
